<compile_context>
chip_gen: v6e
topology: v6e:2x2x1
jax: 0.10.0
libtpu: 0.0.40
codegen_flags: <defaults>
</compile_context>

<pallas_src>
import functools

import jax
import jax.numpy as jnp
from jax import lax
from jax.experimental import pallas as pl
from jax.experimental.pallas import tpu as pltpu


def _round_up(x, m):
    return ((x + m - 1) // m) * m


def _rec_contrastive_loss_kernel(a_ref, p_ref, o_ref, acc_ref, *, margin, eps, n_rows):
    """Grid axis 0 tiles the batch (rows). acc_ref: (1,1) f32 running sum."""
    i = pl.program_id(0)
    tb = a_ref.shape[0]

    @pl.when(i == 0)
    def _():
        acc_ref[...] = jnp.zeros_like(acc_ref)

    a = a_ref[...].astype(jnp.float32)
    p = p_ref[...].astype(jnp.float32)

    diff = a - p + eps                                    # PyTorch pairwise_distance eps
    row_sq = jnp.sum(diff * diff, axis=-1, keepdims=True)  # (tb, 1) lane reduction
    dist = jnp.sqrt(row_sq)                               # per-row L2 distance
    loss = jnp.maximum(dist + margin, 0.0)                # relu(d + margin)

    # Mask rows that are padding (global row index >= n_rows) so the mean is exact.
    row_ids = i * tb + lax.broadcasted_iota(jnp.int32, (tb, 1), 0)
    loss = jnp.where(row_ids < n_rows, loss, 0.0)

    acc_ref[...] += jnp.sum(loss, axis=0, keepdims=True)  # (1,1)

    @pl.when(i == pl.num_programs(0) - 1)
    def _():
        o_ref[...] = acc_ref[...] * (1.0 / n_rows)


def rec_contrastive_loss(anchor, positive, negative=None, margin=1.0,
                         eps=1e-6, block_rows=512):
    """Pallas equivalent of RecContrastiveLoss(margin).forward(anchor, positive, negative).

    anchor/positive: (B, D). Returns a scalar (float32).
    """
    del negative  # the reference forward never uses it
    assert anchor.ndim == 2 and anchor.shape == positive.shape
    B, D = anchor.shape

    # Row tile: multiple of 8 (sublane), capped to keep the double-buffered
    # VMEM footprint small even on v7x (64 MiB / TC).
    tb = min(_round_up(block_rows, 8), _round_up(B, 8))
    B_pad = _round_up(B, tb)
    if B_pad != B:
        pad = B_pad - B
        anchor = jnp.pad(anchor, ((0, pad), (0, 0)))
        positive = jnp.pad(positive, ((0, pad), (0, 0)))

    grid = (B_pad // tb,)
    kernel = functools.partial(
        _rec_contrastive_loss_kernel,
        margin=float(margin), eps=float(eps), n_rows=B,
    )

    out = pl.pallas_call(
        kernel,
        out_shape=jax.ShapeDtypeStruct((1, 1), jnp.float32),
        grid=grid,
        in_specs=[
            pl.BlockSpec((tb, D), lambda i: (i, 0)),
            pl.BlockSpec((tb, D), lambda i: (i, 0)),
        ],
        out_specs=pl.BlockSpec((1, 1), lambda i: (0, 0)),
        scratch_shapes=[pltpu.VMEM((1, 1), jnp.float32)],
        compiler_params=pltpu.CompilerParams(
            dimension_semantics=("arbitrary",),  # row axis is a reduction into one output block
        ),
    )(anchor, positive)
    return out[0, 0]


def _ref_loss(a, p, margin=1.0, eps=1e-6):
    d = jnp.sqrt(jnp.sum((a - p + eps) ** 2, axis=-1))
    return jnp.mean(jnp.maximum(d + margin, 0.0))


if __name__ == "__main__":
    key = jax.random.PRNGKey(0)
    k1, k2, k3 = jax.random.split(key, 3)

    # Small (batch, hidden) features, matching the module's (anchor, positive, negative) inputs.
    anchor = jax.random.normal(k1, (8, 32), dtype=jnp.float32)
    positive = jax.random.normal(k2, (8, 32), dtype=jnp.float32)
    negative = jax.random.normal(k3, (8, 32), dtype=jnp.float32)  # unused by forward

    out = rec_contrastive_loss(anchor, positive, negative, margin=1.0)
    out = jax.block_until_ready(out)
    ref = _ref_loss(anchor, positive, margin=1.0)
    assert out.shape == ()
    assert jnp.allclose(out, ref, rtol=1e-5, atol=1e-5), (out, ref)

    # Ragged batch: exercises the padding + in-kernel row mask path.
    a2 = jax.random.normal(k1, (10, 48), dtype=jnp.float32)
    p2 = jax.random.normal(k2, (10, 48), dtype=jnp.float32)
    out2 = jax.block_until_ready(rec_contrastive_loss(a2, p2, None, margin=0.5))
    ref2 = _ref_loss(a2, p2, margin=0.5)
    assert jnp.allclose(out2, ref2, rtol=1e-5, atol=1e-5), (out2, ref2)

    print("KERNEL_OK")
</pallas_src>

<mosaic_0001>
module attributes {stable_mosaic.version = 11 : i64} {
  func.func @_rec_contrastive_loss_kernel(%arg0: i32, %arg1: memref<8x32xf32, #tpu.memory_space<vmem>>, %arg2: memref<8x32xf32, #tpu.memory_space<vmem>>, %arg3: memref<1x1xf32, #tpu.memory_space<vmem>>, %arg4: memref<1x1xf32, #tpu.memory_space<vmem>>) attributes {dimension_semantics = [#tpu.dimension_semantics<arbitrary>], iteration_bounds = array<i64: 1>, scalar_prefetch = 0 : i64, scratch_operands = 1 : i64, tpu.core_type = #tpu.core_type<tc>, window_params = [{transform_indices = @transform_0, window_bounds = array<i64: 8, 32>}, {transform_indices = @transform_1, window_bounds = array<i64: 8, 32>}, {pipeline_mode = #tpu.pipeline_mode<synchronous>, transform_indices = @transform_2, window_bounds = array<i64: 1, 1>}]} {
    %c0_i32 = arith.constant 0 : i32
    %0 = arith.cmpi eq, %arg0, %c0_i32 : i32
    %1 = arith.extui %0 : i1 to i32
    %c0_i32_0 = arith.constant 0 : i32
    %2 = arith.cmpi ne, %1, %c0_i32_0 : i32
    scf.if %2 {
      %cst_16 = arith.constant 0.000000e+00 : f32
      %32 = vector.broadcast %cst_16 : f32 to vector<1x1xf32>
      %c0_17 = arith.constant 0 : index
      %c0_18 = arith.constant 0 : index
      %33 = vector.load %arg4[%c0_17, %c0_18] : memref<1x1xf32, #tpu.memory_space<vmem>>, vector<1x1xf32>
      tpu.vector_store %arg4[%c0_17, %c0_18], %32 {strides = array<i32>} : memref<1x1xf32, #tpu.memory_space<vmem>>, vector<1x1xf32>,
    } else {
    }
    %c0 = arith.constant 0 : index
    %c0_1 = arith.constant 0 : index
    %3 = vector.load %arg1[%c0, %c0_1] : memref<8x32xf32, #tpu.memory_space<vmem>>, vector<8x32xf32>
    %c0_2 = arith.constant 0 : index
    %c0_3 = arith.constant 0 : index
    %4 = vector.load %arg2[%c0_2, %c0_3] : memref<8x32xf32, #tpu.memory_space<vmem>>, vector<8x32xf32>
    %5 = arith.subf %3, %4 : vector<8x32xf32>
    %cst = arith.constant 9.99999997E-7 : f32
    %6 = vector.broadcast %cst : f32 to vector<8x32xf32>
    %7 = arith.addf %5, %6 : vector<8x32xf32>
    %8 = arith.mulf %7, %7 : vector<8x32xf32>
    %cst_4 = arith.constant dense<0.000000e+00> : vector<8xf32>
    %9 = vector.multi_reduction <add>, %8, %cst_4 [1] : vector<8x32xf32> to vector<8xf32>
    %10 = vector.shape_cast %9 : vector<8xf32> to vector<8x1xf32>
    %11 = math.sqrt %10 : vector<8x1xf32>
    %cst_5 = arith.constant 1.000000e+00 : f32
    %12 = vector.broadcast %cst_5 : f32 to vector<8x1xf32>
    %13 = arith.addf %11, %12 : vector<8x1xf32>
    %cst_6 = arith.constant 0.000000e+00 : f32
    %14 = vector.broadcast %cst_6 : f32 to vector<8x1xf32>
    %15 = arith.maximumf %13, %14 : vector<8x1xf32>
    %c8_i32 = arith.constant 8 : i32
    %16 = arith.muli %arg0, %c8_i32 : i32
    %17 = tpu.iota {dimensions = array<i32: 0>} : vector<8x1xi32>
    %18 = vector.broadcast %16 : i32 to vector<8x1xi32>
    %19 = arith.addi %18, %17 : vector<8x1xi32>
    %c8_i32_7 = arith.constant 8 : i32
    %20 = vector.broadcast %c8_i32_7 : i32 to vector<8x1xi32>
    %21 = arith.cmpi slt, %19, %20 : vector<8x1xi32>
    %cst_8 = arith.constant 0.000000e+00 : f32
    %22 = vector.broadcast %cst_8 : f32 to vector<8x1xf32>
    %23 = arith.select %21, %15, %22 : vector<8x1xi1>, vector<8x1xf32>
    %c0_9 = arith.constant 0 : index
    %c0_10 = arith.constant 0 : index
    %24 = vector.load %arg4[%c0_9, %c0_10] : memref<1x1xf32, #tpu.memory_space<vmem>>, vector<1x1xf32>
    %cst_11 = arith.constant dense<0.000000e+00> : vector<1xf32>
    %25 = vector.multi_reduction <add>, %23, %cst_11 [0] : vector<8x1xf32> to vector<1xf32>
    %26 = vector.shape_cast %25 : vector<1xf32> to vector<1x1xf32>
    %27 = arith.addf %24, %26 : vector<1x1xf32>
    %c0_12 = arith.constant 0 : index
    %c0_13 = arith.constant 0 : index
    %28 = vector.load %arg4[%c0_12, %c0_13] : memref<1x1xf32, #tpu.memory_space<vmem>>, vector<1x1xf32>
    tpu.vector_store %arg4[%c0_12, %c0_13], %27 {strides = array<i32>} : memref<1x1xf32, #tpu.memory_space<vmem>>, vector<1x1xf32>,
    %c0_i32_14 = arith.constant 0 : i32
    %29 = arith.cmpi eq, %arg0, %c0_i32_14 : i32
    %30 = arith.extui %29 : i1 to i32
    %c0_i32_15 = arith.constant 0 : i32
    %31 = arith.cmpi ne, %30, %c0_i32_15 : i32
    scf.if %31 {
      %c0_16 = arith.constant 0 : index
      %c0_17 = arith.constant 0 : index
      %32 = vector.load %arg4[%c0_16, %c0_17] : memref<1x1xf32, #tpu.memory_space<vmem>>, vector<1x1xf32>
      %cst_18 = arith.constant 1.250000e-01 : f32
      %33 = vector.broadcast %cst_18 : f32 to vector<1x1xf32>
      %34 = arith.mulf %32, %33 : vector<1x1xf32>
      %c0_19 = arith.constant 0 : index
      %c0_20 = arith.constant 0 : index
      %35 = vector.load %arg3[%c0_19, %c0_20] : memref<1x1xf32, #tpu.memory_space<vmem>>, vector<1x1xf32>
      tpu.vector_store %arg3[%c0_19, %c0_20], %34 {strides = array<i32>} : memref<1x1xf32, #tpu.memory_space<vmem>>, vector<1x1xf32>,
    } else {
    }
    return
  }
  func.func @transform_0(%arg0: i32) -> (i32, i32) {
    %c0_i32 = arith.constant 0 : i32
    %c0_i32_0 = arith.constant 0 : i32
    return %arg0, %c0_i32 : i32, i32
  }
  func.func @transform_1(%arg0: i32) -> (i32, i32) {
    %c0_i32 = arith.constant 0 : i32
    %c0_i32_0 = arith.constant 0 : i32
    return %arg0, %c0_i32 : i32, i32
  }
  func.func @transform_2(%arg0: i32) -> (i32, i32) {
    %c0_i32 = arith.constant 0 : i32
    %c0_i32_0 = arith.constant 0 : i32
    %c0_i32_1 = arith.constant 0 : i32
    return %c0_i32, %c0_i32_0 : i32, i32
  }
}

</mosaic_0001>

<llo_original>
// kernel: tpu_custom_call.1
$region0: #{tpu_custom_call.1}
  #allocation0 [shape = 'u32[]', space=smem, size = 0x4, offset = 0x4, fixed_abs, tag = 'smem constant byte address 0x4 - core index']
  #allocation1 [shape = 'u32[144,128]{1,0:T(1,128)}', space=vmem, size = 0x12000, scoped, tag = 'internal scratch']
  #allocation2 [shape = 'f32[1,1]{1,0:T(1,128)}', space=vmem, size = 0x200, scoped, tag = 'scratch operand']
  %s0 = inlined_call_operand.hbm [shape: f32[8,32], index: 0, kind: input, shape index: {}]
  %s1 = inlined_call_operand.hbm [shape: f32[8,32], index: 1, kind: input, shape index: {}]
  %s2 = inlined_call_operand.hbm [shape: f32[1,1], index: 2, kind: output, shape index: {}]
  %s3 = sld [smem:[#allocation0]]
  $region34: #{tpu_custom_call.1} parent=0
    _
  %s5 = ssub.s32 1, %s3
  %s6 = scalar_select 0, %s5, %s3
  $region1: #{tpu_custom_call.1} parent=0
    #allocation3 [shape = 'u8[4096]{0}', space=vmem, size = 0x1000, scoped, tag = 'input window, operand 0, single buffered']
    #allocation4 [shape = 's32[1]{0}', space=sflag, size = 0x4, scoped, tag = 'scoped memory for tpu_custom_call.1']
    #allocation5 [shape = 's32[1]{0}', space=sflag, size = 0x4, scoped, tag = 'scoped memory for tpu_custom_call.1']
    #allocation6 [shape = 'u8[4096]{0}', space=vmem, size = 0x1000, scoped, tag = 'input window, operand 1, single buffered']
    #allocation7 [shape = 's32[1]{0}', space=sflag, size = 0x4, scoped, tag = 'scoped memory for tpu_custom_call.1']
    #allocation8 [shape = 'u8[512]{0}', space=vmem, size = 0x400, scoped, tag = 'output window, operand 0, single buffered']
    %7 = vsyncpa [#allocation4], 0
    %8 = vsyncpa [#allocation7], 0
    %9 = vsyncpa [#allocation5], 0
    // Predicated region
    $region2: #{tpu_custom_call.1} parent=1 // pred_check
      _
    $region3: #{tpu_custom_call.1} parent=1 // pred_check_branch
      %11 = sbr.rel (0) target = $region5
    $region4: #{tpu_custom_call.1} parent=1 // pred_region
      %s13 = ssub.s32 128, 128
      %14 = vsyncadd [#allocation4], %s13
      %s16 = sshll.u32 [#allocation3], 4
      %s17 = int_to_ptr.vmem [resolvable:$true] %s16
      %19 = dma.hbm_to_vmem [thread:$0]  %s0, 128, %s17, [#allocation4]
    $region5: #{tpu_custom_call.1} parent=1 // pred_fallthru
      _
    // Predicated region
    $region6: #{tpu_custom_call.1} parent=1 // pred_check
      _
    $region7: #{tpu_custom_call.1} parent=1 // pred_check_branch
      %21 = sbr.rel (0) target = $region9
    $region8: #{tpu_custom_call.1} parent=1 // pred_region
      %s23 = ssub.s32 128, 128
      %24 = vsyncadd [#allocation7], %s23
      %s26 = sshll.u32 [#allocation6], 4
      %s27 = int_to_ptr.vmem [resolvable:$true] %s26
      %29 = dma.hbm_to_vmem [thread:$0]  %s1, 128, %s27, [#allocation7]
    $region9: #{tpu_custom_call.1} parent=1 // pred_fallthru
      _
    // Predicated region
    $region10: #{tpu_custom_call.1} parent=1 // pred_check
      _
    $region11: #{tpu_custom_call.1} parent=1 // pred_check_branch
      %31 = sbr.rel (0) target = $region13
    $region12: #{tpu_custom_call.1} parent=1 // pred_region
      %32 = dma.done [#allocation4], 128
    $region13: #{tpu_custom_call.1} parent=1 // pred_fallthru
      _
    // Predicated region
    $region14: #{tpu_custom_call.1} parent=1 // pred_check
      _
    $region15: #{tpu_custom_call.1} parent=1 // pred_check_branch
      %34 = sbr.rel (0) target = $region17
    $region16: #{tpu_custom_call.1} parent=1 // pred_region
      %35 = dma.done [#allocation7], 128
    $region17: #{tpu_custom_call.1} parent=1 // pred_fallthru
      _
    %p36 = scmp.eq.s32.totalorder 0, 0
    // Predicated region
    $region18: #{tpu_custom_call.1} parent=1 // pred_check
      %p37 = pneg %p36
    $region19: #{tpu_custom_call.1} parent=1 // pred_check_branch
      %39 = sbr.rel (%p37) target = $region21
    $region20: #{tpu_custom_call.1} parent=1 // pred_region
      %vm40 = vcmask 0
      %41 = vst.msk [vmem:[#allocation2] sm:$0x1] %vm40, 0.0
    $region21: #{tpu_custom_call.1} parent=1 // pred_fallthru
      _
    %v42 = vld [vmem:[#allocation3] sm:$0xff]
    %v43 = vld [vmem:[#allocation6] sm:$0xff]
    %v44 = vsub.f32 %v42, %v43
    %v45 = vadd.f32 %v44, 1e-06
    %v46 = vmul.f32 %v45, %v45
    %vm47 = vcmask 261120
    %v48 = vsel %vm47, %v46, 0.0
    %49 = vadd.xlane.f32.xlu0 %v48
    %v50 = vpop.xlane.xlu0 %49
    %v51 = vrsqrt.pop %v50
    %v52 = vmul.f32 %v50, %v51
    %vm53 = vcmp.eq.f32.partialorder %v50, inf
    %v54 = vsel %vm53, %v50, %v52
    %vm55 = vcmp.eq.f32.partialorder %v50, 0.0
    %v56 = vand.u32 %v50, 2147483648
    %v57 = vsel %vm55, %v56, %v54
    %v58 = vadd.f32 %v57, 1.0
    %v59 = vmax.f32 %v58, 0.0
    %s60 = smul.u32 0, 8
    %v61 = vlaneseq
    %v62 = vshrl.u32 %v61, 7
    %v63 = vstv %s60
    %v64 = vadd.s32 %v63, %v62
    %vm65 = vcmp.lt.s32.totalorder %v64, 8
    %v66 = vsel %vm65, %v59, 0.0
    %v67 = vld [vmem:[#allocation2] sm:$0x1]
    %v68 = vrot.slane %v66, 4
    %v69 = vadd.f32 %v66, %v68
    %v70 = vrot.slane %v69, 2
    %v71 = vadd.f32 %v69, %v70
    %v72 = vrot.slane %v71, 1
    %v73 = vadd.f32 %v71, %v72
    %v74 = vadd.f32 %v67, %v73
    %vm75 = vcmask 0
    %76 = vst.msk [vmem:[#allocation2] sm:$0x1] %vm75, %v74
    // Predicated region
    $region22: #{tpu_custom_call.1} parent=1 // pred_check
      %p77 = pneg %p36
    $region23: #{tpu_custom_call.1} parent=1 // pred_check_branch
      %79 = sbr.rel (%p77) target = $region25
    $region24: #{tpu_custom_call.1} parent=1 // pred_region
      %v80 = vld [vmem:[#allocation2] sm:$0x1]
      %v81 = vmul.f32 %v80, 0.125
      %82 = vst.msk [vmem:[#allocation8] sm:$0x1] %vm75, %v81
    $region25: #{tpu_custom_call.1} parent=1 // pred_fallthru
      _
    // Predicated region
    $region26: #{tpu_custom_call.1} parent=1 // pred_check
      _
    $region27: #{tpu_custom_call.1} parent=1 // pred_check_branch
      %84 = sbr.rel (0) target = $region29
    $region28: #{tpu_custom_call.1} parent=1 // pred_region
      %s86 = ssub.s32 16, 16
      %87 = vsyncadd [#allocation5], %s86
      %s89 = sshll.u32 [#allocation8], 4
      %s90 = int_to_ptr.vmem [resolvable:$true] %s89
      %92 = dma.vmem_to_hbm [thread:$0]  %s90, 16, %s2, [#allocation5]
    $region29: #{tpu_custom_call.1} parent=1 // pred_fallthru
      _
    // Predicated region
    $region30: #{tpu_custom_call.1} parent=1 // pred_check
      _
    $region31: #{tpu_custom_call.1} parent=1 // pred_check_branch
      %94 = sbr.rel (0) target = $region33
    $region32: #{tpu_custom_call.1} parent=1 // pred_region
      %95 = dma.done [#allocation5], 16
    $region33: #{tpu_custom_call.1} parent=1 // pred_fallthru
      _
    %96 = vsyncpa [#allocation4], 1
    %97 = vsyncpa [#allocation7], 1
    %98 = vsyncpa [#allocation5], 1

</llo_original>
